<compile_context>
chip_gen: v7x
topology: tpu7x:2x2x1
jax: 0.10.0
libtpu: 0.0.40
codegen_flags: <defaults>
</compile_context>

<pallas_src>
import jax
import jax.numpy as jnp
from jax.experimental import pallas as pl
from jax.experimental.pallas import tpu as pltpu

REPEATS = 12
V_COLS = 2
OUT_COLS = REPEATS * V_COLS  # 24
MAX_TILE_B = 512             # rows per block when B is large (multiple of 8)


def _cat_kernel(v_ref, o_ref):
    # v_ref: (TILE_B, 2)  o_ref: (TILE_B, 24)
    v = v_ref[...]
    # Unrolled static-slice stores == torch.cat([v]*12, dim=1).
    for r in range(REPEATS):
        o_ref[:, r * V_COLS:(r + 1) * V_COLS] = v


def model_forward(x, key):
    """Equivalent of Model.forward(x). Only x.shape[0] is used (as in torch)."""
    b = x.shape[0]

    # torch.rand(B, 2): uniform [0, 1) float32.  RNG stays in XLA so the
    # kernel body uses only portable primitives (runs on TPU and interpret).
    v = jax.random.uniform(key, (b, V_COLS), dtype=jnp.float32)

    # Tile the batch dim: full-batch block at small B (block shape equal to
    # the array dim is always legal), capped 512-row blocks at large B.
    tile_b = MAX_TILE_B if b >= MAX_TILE_B else b
    grid = (pl.cdiv(b, tile_b),)

    return pl.pallas_call(
        _cat_kernel,
        out_shape=jax.ShapeDtypeStruct((b, OUT_COLS), jnp.float32),
        grid=grid,
        in_specs=[pl.BlockSpec((tile_b, V_COLS), lambda i: (i, 0))],
        out_specs=pl.BlockSpec((tile_b, OUT_COLS), lambda i: (i, 0)),
        compiler_params=pltpu.CompilerParams(
            dimension_semantics=("parallel",)),
    )(v)


if __name__ == "__main__":
    root = jax.random.PRNGKey(0)
    key_x, key_v = jax.random.split(root)

    # Same shape as the original script: x = torch.randn(32, 224)
    x = jax.random.normal(key_x, (32, 224), dtype=jnp.float32)

    out = model_forward(x, key_v)
    out = jax.block_until_ready(out)

    # Sanity checks: shape, dtype, range, and the 12-fold repetition structure.
    assert out.shape == (32, OUT_COLS), out.shape
    assert out.dtype == jnp.float32
    assert bool(jnp.all(out >= 0.0)) and bool(jnp.all(out < 1.0))
    first = out[:, :V_COLS]
    for r in range(1, REPEATS):
        chunk = out[:, r * V_COLS:(r + 1) * V_COLS]
        assert bool(jnp.all(chunk == first)), f"repeat {r} mismatch"

    print("KERNEL_OK")
</pallas_src>

<mosaic_0001>
module attributes {stable_mosaic.version = 11 : i64} {
  func.func @_cat_kernel(%arg0: i32, %arg1: memref<32x2xf32, #tpu.memory_space<vmem>>, %arg2: memref<32x24xf32, #tpu.memory_space<vmem>>) attributes {dimension_semantics = [#tpu.dimension_semantics<parallel>], iteration_bounds = array<i64: 1>, scalar_prefetch = 0 : i64, scratch_operands = 0 : i64, tpu.core_type = #tpu.core_type<tc>, window_params = [{transform_indices = @transform_0, window_bounds = array<i64: 32, 2>}, {transform_indices = @transform_1, window_bounds = array<i64: 32, 24>}]} {
    %c0 = arith.constant 0 : index
    %c0_0 = arith.constant 0 : index
    %0 = vector.load %arg1[%c0, %c0_0] : memref<32x2xf32, #tpu.memory_space<vmem>>, vector<32x2xf32>
    %c0_1 = arith.constant 0 : index
    %c0_2 = arith.constant 0 : index
    %1 = vector.load %arg2[%c0_1, %c0_2] : memref<32x24xf32, #tpu.memory_space<vmem>>, vector<32x2xf32>
    tpu.vector_store %arg2[%c0_1, %c0_2], %0 {strides = array<i32>} : memref<32x24xf32, #tpu.memory_space<vmem>>, vector<32x2xf32>,
    %c0_3 = arith.constant 0 : index
    %c2 = arith.constant 2 : index
    %2 = vector.load %arg2[%c0_3, %c2] : memref<32x24xf32, #tpu.memory_space<vmem>>, vector<32x2xf32>
    tpu.vector_store %arg2[%c0_3, %c2], %0 {strides = array<i32>} : memref<32x24xf32, #tpu.memory_space<vmem>>, vector<32x2xf32>,
    %c0_4 = arith.constant 0 : index
    %c4 = arith.constant 4 : index
    %3 = vector.load %arg2[%c0_4, %c4] : memref<32x24xf32, #tpu.memory_space<vmem>>, vector<32x2xf32>
    tpu.vector_store %arg2[%c0_4, %c4], %0 {strides = array<i32>} : memref<32x24xf32, #tpu.memory_space<vmem>>, vector<32x2xf32>,
    %c0_5 = arith.constant 0 : index
    %c6 = arith.constant 6 : index
    %4 = vector.load %arg2[%c0_5, %c6] : memref<32x24xf32, #tpu.memory_space<vmem>>, vector<32x2xf32>
    tpu.vector_store %arg2[%c0_5, %c6], %0 {strides = array<i32>} : memref<32x24xf32, #tpu.memory_space<vmem>>, vector<32x2xf32>,
    %c0_6 = arith.constant 0 : index
    %c8 = arith.constant 8 : index
    %5 = vector.load %arg2[%c0_6, %c8] : memref<32x24xf32, #tpu.memory_space<vmem>>, vector<32x2xf32>
    tpu.vector_store %arg2[%c0_6, %c8], %0 {strides = array<i32>} : memref<32x24xf32, #tpu.memory_space<vmem>>, vector<32x2xf32>,
    %c0_7 = arith.constant 0 : index
    %c10 = arith.constant 10 : index
    %6 = vector.load %arg2[%c0_7, %c10] : memref<32x24xf32, #tpu.memory_space<vmem>>, vector<32x2xf32>
    tpu.vector_store %arg2[%c0_7, %c10], %0 {strides = array<i32>} : memref<32x24xf32, #tpu.memory_space<vmem>>, vector<32x2xf32>,
    %c0_8 = arith.constant 0 : index
    %c12 = arith.constant 12 : index
    %7 = vector.load %arg2[%c0_8, %c12] : memref<32x24xf32, #tpu.memory_space<vmem>>, vector<32x2xf32>
    tpu.vector_store %arg2[%c0_8, %c12], %0 {strides = array<i32>} : memref<32x24xf32, #tpu.memory_space<vmem>>, vector<32x2xf32>,
    %c0_9 = arith.constant 0 : index
    %c14 = arith.constant 14 : index
    %8 = vector.load %arg2[%c0_9, %c14] : memref<32x24xf32, #tpu.memory_space<vmem>>, vector<32x2xf32>
    tpu.vector_store %arg2[%c0_9, %c14], %0 {strides = array<i32>} : memref<32x24xf32, #tpu.memory_space<vmem>>, vector<32x2xf32>,
    %c0_10 = arith.constant 0 : index
    %c16 = arith.constant 16 : index
    %9 = vector.load %arg2[%c0_10, %c16] : memref<32x24xf32, #tpu.memory_space<vmem>>, vector<32x2xf32>
    tpu.vector_store %arg2[%c0_10, %c16], %0 {strides = array<i32>} : memref<32x24xf32, #tpu.memory_space<vmem>>, vector<32x2xf32>,
    %c0_11 = arith.constant 0 : index
    %c18 = arith.constant 18 : index
    %10 = vector.load %arg2[%c0_11, %c18] : memref<32x24xf32, #tpu.memory_space<vmem>>, vector<32x2xf32>
    tpu.vector_store %arg2[%c0_11, %c18], %0 {strides = array<i32>} : memref<32x24xf32, #tpu.memory_space<vmem>>, vector<32x2xf32>,
    %c0_12 = arith.constant 0 : index
    %c20 = arith.constant 20 : index
    %11 = vector.load %arg2[%c0_12, %c20] : memref<32x24xf32, #tpu.memory_space<vmem>>, vector<32x2xf32>
    tpu.vector_store %arg2[%c0_12, %c20], %0 {strides = array<i32>} : memref<32x24xf32, #tpu.memory_space<vmem>>, vector<32x2xf32>,
    %c0_13 = arith.constant 0 : index
    %c22 = arith.constant 22 : index
    %12 = vector.load %arg2[%c0_13, %c22] : memref<32x24xf32, #tpu.memory_space<vmem>>, vector<32x2xf32>
    tpu.vector_store %arg2[%c0_13, %c22], %0 {strides = array<i32>} : memref<32x24xf32, #tpu.memory_space<vmem>>, vector<32x2xf32>,
    return
  }
  func.func @transform_0(%arg0: i32) -> (i32, i32) {
    %c0_i32 = arith.constant 0 : i32
    %c0_i32_0 = arith.constant 0 : i32
    return %arg0, %c0_i32 : i32, i32
  }
  func.func @transform_1(%arg0: i32) -> (i32, i32) {
    %c0_i32 = arith.constant 0 : i32
    %c0_i32_0 = arith.constant 0 : i32
    return %arg0, %c0_i32 : i32, i32
  }
}

</mosaic_0001>

<llo_original>
// kernel: tpu_custom_call.1
$region0: #{tpu_custom_call.1}
  #allocation0 [shape = 'u32[]', space=smem, size = 0x4, offset = 0x4, fixed_abs, tag = 'smem constant byte address 0x4 - core index']
  #allocation1 [shape = 'u32[144,128]{1,0:T(1,128)}', space=vmem, size = 0x12000, scoped, tag = 'internal scratch']
  %s0 = inlined_call_operand.vmem [shape: f32[32,2], index: 0, kind: input, shape index: {}]
  %s1 = inlined_call_operand.vmem [shape: f32[32,24], index: 1, kind: output, shape index: {}]
  %s2 = sld [smem:[#allocation0]]
  $region14: #{tpu_custom_call.1} parent=0
    _
  %s4 = ssub.s32 1, %s2
  %s5 = scalar_select 0, %s4, %s2
  // Predicated region
  $region2: #{tpu_custom_call.1} parent=0 // pred_check
    _
  $region3: #{tpu_custom_call.1} parent=0 // pred_check_branch
    %7 = sbr.rel (0) target = $region5
  $region4: #{tpu_custom_call.1} parent=0 // pred_region
    _
  $region5: #{tpu_custom_call.1} parent=0 // pred_fallthru
    _
  %v8 = vld [vmem:[%s0] sm:$0xff]
  %v9 = vld [vmem:[%s0 + $0x8] sm:$0xff]
  %v10 = vld [vmem:[%s0 + $0x10] sm:$0xff]
  %v11 = vld [vmem:[%s0 + $0x18] sm:$0xff]
  %vm12 = vcmask 15360
  %13 = vst.msk [vmem:[%s1] sm:$0xff] %vm12, %v8
  %14 = vst.msk [vmem:[%s1 + $0x8] sm:$0xff] %vm12, %v9
  %15 = vst.msk [vmem:[%s1 + $0x10] sm:$0xff] %vm12, %v10
  %16 = vst.msk [vmem:[%s1 + $0x18] sm:$0xff] %vm12, %v11
  %21 = vrot.lane.b32.xlu0 %v8, 2
  %v22 = vpop.permute.xlu0 %21
  %23 = vrot.lane.b32.xlu0 %v9, 2
  %v24 = vpop.permute.xlu0 %23
  %25 = vrot.lane.b32.xlu0 %v10, 2
  %v26 = vpop.permute.xlu0 %25
  %27 = vrot.lane.b32.xlu0 %v11, 2
  %v28 = vpop.permute.xlu0 %27
  %vm33 = vcmask 31760
  %34 = vst.msk [vmem:[%s1] sm:$0xff] %vm33, %v22
  %35 = vst.msk [vmem:[%s1 + $0x8] sm:$0xff] %vm33, %v24
  %36 = vst.msk [vmem:[%s1 + $0x10] sm:$0xff] %vm33, %v26
  %37 = vst.msk [vmem:[%s1 + $0x18] sm:$0xff] %vm33, %v28
  %38 = vrot.lane.b32.xlu0 %v8, 4
  %v39 = vpop.permute.xlu0 %38
  %40 = vrot.lane.b32.xlu0 %v9, 4
  %v41 = vpop.permute.xlu0 %40
  %42 = vrot.lane.b32.xlu0 %v10, 4
  %v43 = vpop.permute.xlu0 %42
  %44 = vrot.lane.b32.xlu0 %v11, 4
  %v45 = vpop.permute.xlu0 %44
  %vm50 = vcmask 48160
  %51 = vst.msk [vmem:[%s1] sm:$0xff] %vm50, %v39
  %52 = vst.msk [vmem:[%s1 + $0x8] sm:$0xff] %vm50, %v41
  %53 = vst.msk [vmem:[%s1 + $0x10] sm:$0xff] %vm50, %v43
  %54 = vst.msk [vmem:[%s1 + $0x18] sm:$0xff] %vm50, %v45
  %55 = vrot.lane.b32.xlu0 %v8, 6
  %v56 = vpop.permute.xlu0 %55
  %57 = vrot.lane.b32.xlu0 %v9, 6
  %v58 = vpop.permute.xlu0 %57
  %59 = vrot.lane.b32.xlu0 %v10, 6
  %v60 = vpop.permute.xlu0 %59
  %61 = vrot.lane.b32.xlu0 %v11, 6
  %v62 = vpop.permute.xlu0 %61
  %vm67 = vcmask 64560
  %68 = vst.msk [vmem:[%s1] sm:$0xff] %vm67, %v56
  %69 = vst.msk [vmem:[%s1 + $0x8] sm:$0xff] %vm67, %v58
  %70 = vst.msk [vmem:[%s1 + $0x10] sm:$0xff] %vm67, %v60
  %71 = vst.msk [vmem:[%s1 + $0x18] sm:$0xff] %vm67, %v62
  %72 = vrot.lane.b32.xlu0 %v8, 8
  %v73 = vpop.permute.xlu0 %72
  %74 = vrot.lane.b32.xlu0 %v9, 8
  %v75 = vpop.permute.xlu0 %74
  %76 = vrot.lane.b32.xlu0 %v10, 8
  %v77 = vpop.permute.xlu0 %76
  %78 = vrot.lane.b32.xlu0 %v11, 8
  %v79 = vpop.permute.xlu0 %78
  %vm84 = vcmask 80960
  %85 = vst.msk [vmem:[%s1] sm:$0xff] %vm84, %v73
  %86 = vst.msk [vmem:[%s1 + $0x8] sm:$0xff] %vm84, %v75
  %87 = vst.msk [vmem:[%s1 + $0x10] sm:$0xff] %vm84, %v77
  %88 = vst.msk [vmem:[%s1 + $0x18] sm:$0xff] %vm84, %v79
  %89 = vrot.lane.b32.xlu0 %v8, 10
  %v90 = vpop.permute.xlu0 %89
  %91 = vrot.lane.b32.xlu0 %v9, 10
  %v92 = vpop.permute.xlu0 %91
  %93 = vrot.lane.b32.xlu0 %v10, 10
  %v94 = vpop.permute.xlu0 %93
  %95 = vrot.lane.b32.xlu0 %v11, 10
  %v96 = vpop.permute.xlu0 %95
  %vm101 = vcmask 97360
  %102 = vst.msk [vmem:[%s1] sm:$0xff] %vm101, %v90
  %103 = vst.msk [vmem:[%s1 + $0x8] sm:$0xff] %vm101, %v92
  %104 = vst.msk [vmem:[%s1 + $0x10] sm:$0xff] %vm101, %v94
  %105 = vst.msk [vmem:[%s1 + $0x18] sm:$0xff] %vm101, %v96
  %106 = vrot.lane.b32.xlu0 %v8, 12
  %v107 = vpop.permute.xlu0 %106
  %108 = vrot.lane.b32.xlu0 %v9, 12
  %v109 = vpop.permute.xlu0 %108
  %110 = vrot.lane.b32.xlu0 %v10, 12
  %v111 = vpop.permute.xlu0 %110
  %112 = vrot.lane.b32.xlu0 %v11, 12
  %v113 = vpop.permute.xlu0 %112
  %vm118 = vcmask 113760
  %119 = vst.msk [vmem:[%s1] sm:$0xff] %vm118, %v107
  %120 = vst.msk [vmem:[%s1 + $0x8] sm:$0xff] %vm118, %v109
  %121 = vst.msk [vmem:[%s1 + $0x10] sm:$0xff] %vm118, %v111
  %122 = vst.msk [vmem:[%s1 + $0x18] sm:$0xff] %vm118, %v113
  %123 = vrot.lane.b32.xlu0 %v8, 14
  %v124 = vpop.permute.xlu0 %123
  %125 = vrot.lane.b32.xlu0 %v9, 14
  %v126 = vpop.permute.xlu0 %125
  %127 = vrot.lane.b32.xlu0 %v10, 14
  %v128 = vpop.permute.xlu0 %127
  %129 = vrot.lane.b32.xlu0 %v11, 14
  %v130 = vpop.permute.xlu0 %129
  %vm135 = vcmask 130160
  %136 = vst.msk [vmem:[%s1] sm:$0xff] %vm135, %v124
  %137 = vst.msk [vmem:[%s1 + $0x8] sm:$0xff] %vm135, %v126
  %138 = vst.msk [vmem:[%s1 + $0x10] sm:$0xff] %vm135, %v128
  %139 = vst.msk [vmem:[%s1 + $0x18] sm:$0xff] %vm135, %v130
  %140 = vrot.lane.b32.xlu0 %v8, 16
  %v141 = vpop.permute.xlu0 %140
  %142 = vrot.lane.b32.xlu0 %v9, 16
  %v143 = vpop.permute.xlu0 %142
  %144 = vrot.lane.b32.xlu0 %v10, 16
  %v145 = vpop.permute.xlu0 %144
  %146 = vrot.lane.b32.xlu0 %v11, 16
  %v147 = vpop.permute.xlu0 %146
  %vm152 = vcmask 146560
  %153 = vst.msk [vmem:[%s1] sm:$0xff] %vm152, %v141
  %154 = vst.msk [vmem:[%s1 + $0x8] sm:$0xff] %vm152, %v143
  %155 = vst.msk [vmem:[%s1 + $0x10] sm:$0xff] %vm152, %v145
  %156 = vst.msk [vmem:[%s1 + $0x18] sm:$0xff] %vm152, %v147
  %157 = vrot.lane.b32.xlu0 %v8, 18
  %v158 = vpop.permute.xlu0 %157
  %159 = vrot.lane.b32.xlu0 %v9, 18
  %v160 = vpop.permute.xlu0 %159
  %161 = vrot.lane.b32.xlu0 %v10, 18
  %v162 = vpop.permute.xlu0 %161
  %163 = vrot.lane.b32.xlu0 %v11, 18
  %v164 = vpop.permute.xlu0 %163
  %vm169 = vcmask 162960
  %170 = vst.msk [vmem:[%s1] sm:$0xff] %vm169, %v158
  %171 = vst.msk [vmem:[%s1 + $0x8] sm:$0xff] %vm169, %v160
  %172 = vst.msk [vmem:[%s1 + $0x10] sm:$0xff] %vm169, %v162
  %173 = vst.msk [vmem:[%s1 + $0x18] sm:$0xff] %vm169, %v164
  %174 = vrot.lane.b32.xlu0 %v8, 20
  %v175 = vpop.permute.xlu0 %174
  %176 = vrot.lane.b32.xlu0 %v9, 20
  %v177 = vpop.permute.xlu0 %176
  %178 = vrot.lane.b32.xlu0 %v10, 20
  %v179 = vpop.permute.xlu0 %178
  %180 = vrot.lane.b32.xlu0 %v11, 20
  %v181 = vpop.permute.xlu0 %180
  %vm186 = vcmask 179360
  %187 = vst.msk [vmem:[%s1] sm:$0xff] %vm186, %v175
  %188 = vst.msk [vmem:[%s1 + $0x8] sm:$0xff] %vm186, %v177
  %189 = vst.msk [vmem:[%s1 + $0x10] sm:$0xff] %vm186, %v179
  %190 = vst.msk [vmem:[%s1 + $0x18] sm:$0xff] %vm186, %v181
  %191 = vrot.lane.b32.xlu0 %v8, 22
  %v192 = vpop.permute.xlu0 %191
  %193 = vrot.lane.b32.xlu0 %v9, 22
  %v194 = vpop.permute.xlu0 %193
  %195 = vrot.lane.b32.xlu0 %v10, 22
  %v196 = vpop.permute.xlu0 %195
  %197 = vrot.lane.b32.xlu0 %v11, 22
  %v198 = vpop.permute.xlu0 %197
  %vm203 = vcmask 195760
  %204 = vst.msk [vmem:[%s1] sm:$0xff] %vm203, %v192
  %205 = vst.msk [vmem:[%s1 + $0x8] sm:$0xff] %vm203, %v194
  %206 = vst.msk [vmem:[%s1 + $0x10] sm:$0xff] %vm203, %v196
  %207 = vst.msk [vmem:[%s1 + $0x18] sm:$0xff] %vm203, %v198
  // Predicated region
  $region6: #{tpu_custom_call.1} parent=0 // pred_check
    _
  $region7: #{tpu_custom_call.1} parent=0 // pred_check_branch
    %209 = sbr.rel (0) target = $region9
  $region8: #{tpu_custom_call.1} parent=0 // pred_region
    _
  $region9: #{tpu_custom_call.1} parent=0 // pred_fallthru
    _
  // Predicated region
  $region10: #{tpu_custom_call.1} parent=0 // pred_check
    _
  $region11: #{tpu_custom_call.1} parent=0 // pred_check_branch
    %211 = sbr.rel (0) target = $region13
  $region12: #{tpu_custom_call.1} parent=0 // pred_region
    _
  $region13: #{tpu_custom_call.1} parent=0 // pred_fallthru
    _

</llo_original>
